<compile_context>
chip_gen: v7x
topology: tpu7x:2x2x1
jax: 0.10.0
libtpu: 0.0.40
codegen_flags: <defaults>
</compile_context>

<pallas_src>
import functools
import math

import jax
import jax.numpy as jnp
from jax.experimental import pallas as pl
from jax.experimental.pallas import tpu as pltpu

_TARGET_BLOCK_BYTES = 2 * 1024 * 1024   # ~2 MiB per block (>=512 KiB hits roofline)
_VMEM_LIMIT_BYTES = 32 * 1024 * 1024    # safe on v7x (64 MiB physical) and v5e/v6e


def _apply(left, right, op):
    if op == "add":
        return left + right
    if op == "sub":
        return left - right
    if op == "mul":
        return left * right
    if op == "div":
        return left / right
    raise ValueError(f"unsupported op: {op}")


def _scalar_kernel(x_ref, c_ref, o_ref, *, op, apply_right, out_dtype):
    # c_ref: (1,) scalar in SMEM; broadcast against the whole x block.
    x = x_ref[...].astype(out_dtype)
    c = c_ref[0].astype(out_dtype)
    left, right = (c, x) if apply_right else (x, c)
    o_ref[...] = _apply(left, right, op)


def _binary_kernel(x_ref, c_ref, o_ref, *, op, apply_right, out_dtype):
    # c_ref: (block_rows, 1) per-row constant OR a full (block_rows, width)
    # block; jnp broadcasting handles both.
    x = x_ref[...].astype(out_dtype)
    c = c_ref[...].astype(out_dtype)
    left, right = (c, x) if apply_right else (x, c)
    o_ref[...] = _apply(left, right, op)


def _compiler_params():
    return pltpu.CompilerParams(dimension_semantics=("parallel",),
                                vmem_limit_bytes=_VMEM_LIMIT_BYTES)


def _pick_width(total):
    for w in (1024, 512, 256, 128):
        if total % w == 0:
            return w
    return None


def _block_rows(rows, row_bytes):
    br = _TARGET_BLOCK_BYTES // max(row_bytes, 1)
    br = max(8, (br // 8) * 8)          # multiple of 8 sublanes (and of 32 for packed)
    return rows if rows <= br else br   # partial edge block is masked by Pallas


def _run_scalar(x, const, op, apply_right, out_dtype):
    total = x.size
    width = _pick_width(total)
    if width is None or total == 0:
        return None
    rows = total // width
    x2 = x.reshape(rows, width)         # zero-copy view of contiguous x
    br = _block_rows(rows, width * x.dtype.itemsize)
    grid = (pl.cdiv(rows, br),)

    # Transport the scalar through SMEM in a 32-bit container.
    smem_dtype = jnp.float32 if jnp.issubdtype(out_dtype, jnp.floating) else jnp.int32
    c_smem = const.reshape(()).astype(out_dtype).astype(smem_dtype).reshape(1)

    kernel = functools.partial(_scalar_kernel, op=op, apply_right=apply_right,
                               out_dtype=out_dtype)
    out2 = pl.pallas_call(
        kernel,
        out_shape=jax.ShapeDtypeStruct((rows, width), out_dtype),
        grid_spec=pltpu.PrefetchScalarGridSpec(
            num_scalar_prefetch=0,
            grid=grid,
            in_specs=[
                pl.BlockSpec((br, width), lambda i: (i, 0)),
                pl.BlockSpec(memory_space=pltpu.MemorySpace.SMEM),
            ],
            out_specs=pl.BlockSpec((br, width), lambda i: (i, 0)),
        ),
        compiler_params=_compiler_params(),
    )(x2, c_smem)
    return out2.reshape(x.shape)


def _run_rowconst(x, const, op, apply_right, out_dtype):
    # const varies only over leading dims of x (e.g. (C,1,1) against NCHW).
    nd = x.ndim
    if nd == 0:
        return None
    cshape = (1,) * (nd - const.ndim) + const.shape
    split = nd
    while split > 0 and cshape[split - 1] == 1:
        split -= 1
    if split == 0 or split == nd:
        return None                      # scalar-like, or varies along trailing dims
    cols = math.prod(x.shape[split:])
    rows = math.prod(x.shape[:split])
    itemsize = max(x.dtype.itemsize, jnp.dtype(out_dtype).itemsize)
    if rows == 0 or cols < 128 or 8 * cols * itemsize > 4 * 1024 * 1024:
        return None

    x2 = x.reshape(rows, cols)           # zero-copy view
    crow = jnp.broadcast_to(const.reshape(cshape[:split]),
                            x.shape[:split]).reshape(rows, 1).astype(out_dtype)

    br = _block_rows(rows, cols * itemsize)
    grid = (pl.cdiv(rows, br),)
    kernel = functools.partial(_binary_kernel, op=op, apply_right=apply_right,
                               out_dtype=out_dtype)
    out2 = pl.pallas_call(
        kernel,
        out_shape=jax.ShapeDtypeStruct((rows, cols), out_dtype),
        grid_spec=pltpu.PrefetchScalarGridSpec(
            num_scalar_prefetch=0,
            grid=grid,
            in_specs=[
                pl.BlockSpec((br, cols), lambda i: (i, 0)),
                pl.BlockSpec((br, 1), lambda i: (i, 0)),   # tiny per-row constant
            ],
            out_specs=pl.BlockSpec((br, cols), lambda i: (i, 0)),
        ),
        compiler_params=_compiler_params(),
    )(x2, crow)
    return out2.reshape(x.shape)


def _run_dense(x, const, op, apply_right, out_dtype, out_shape):
    # General fallback: stream both (broadcast) operands with large blocks.
    xb = jnp.broadcast_to(x, out_shape)
    cb = jnp.broadcast_to(const, out_shape)
    total = max(math.prod(out_shape) if out_shape else 1, 1)
    width = _pick_width(total)
    if width is None:
        # Awkward sizes only: pad up to a lane multiple.  The padded tail may
        # compute inf/NaN for 'div' but those elements are sliced off below.
        width = 128
        padded = pl.cdiv(total, width) * width
        xf = jnp.pad(xb.reshape(-1), (0, padded - total))
        cf = jnp.pad(cb.reshape(-1), (0, padded - total))
    else:
        padded = total
        xf = xb.reshape(-1)
        cf = cb.reshape(-1)
    rows = padded // width
    itemsize = max(xf.dtype.itemsize, cf.dtype.itemsize,
                   jnp.dtype(out_dtype).itemsize)
    br = _block_rows(rows, width * itemsize)
    grid = (pl.cdiv(rows, br),)
    kernel = functools.partial(_binary_kernel, op=op, apply_right=apply_right,
                               out_dtype=out_dtype)
    out2 = pl.pallas_call(
        kernel,
        out_shape=jax.ShapeDtypeStruct((rows, width), out_dtype),
        grid_spec=pltpu.PrefetchScalarGridSpec(
            num_scalar_prefetch=0,
            grid=grid,
            in_specs=[
                pl.BlockSpec((br, width), lambda i: (i, 0)),
                pl.BlockSpec((br, width), lambda i: (i, 0)),
            ],
            out_specs=pl.BlockSpec((br, width), lambda i: (i, 0)),
        ),
        compiler_params=_compiler_params(),
    )(xf.reshape(rows, width), cf.reshape(rows, width))
    return out2.reshape(-1)[:total].reshape(out_shape)


def unbinary_op(x, const_val, op, apply_right=False):
    """Pallas TPU implementation of UnbinaryOp.forward."""
    x = jnp.asarray(x)
    const = jnp.asarray(const_val)
    # TODO(synk): jnp.promote_types does not reproduce torch's weak-scalar
    # promotion when const_val originates from a Python scalar and x is
    # low-precision; irrelevant for same-dtype inputs.
    out_dtype = jnp.promote_types(x.dtype, const.dtype)
    if op == "div":  # torch's '/' is true division
        out_dtype = jnp.promote_types(out_dtype, jnp.float32)
    out_shape = jnp.broadcast_shapes(x.shape, const.shape)

    if out_shape == x.shape and x.size > 0:
        if const.size == 1:
            out = _run_scalar(x, const, op, apply_right, out_dtype)
            if out is not None:
                return out
        else:
            out = _run_rowconst(x, const, op, apply_right, out_dtype)
            if out is not None:
                return out
    return _run_dense(x, const, op, apply_right, out_dtype, out_shape)


if __name__ == "__main__":
    key = jax.random.PRNGKey(0)
    # x in NCHW: batch=2, channels=4, spatial=16
    x = jax.random.normal(key, (2, 4, 16, 16), dtype=jnp.float32)

    const_scalar = jnp.float32(1.5)                                        # scalar path
    const_per_ch = jnp.arange(4, dtype=jnp.float32).reshape(4, 1, 1) + 0.5  # per-row path
    const_spatial = jnp.linspace(0.5, 2.0, 16 * 16,
                                 dtype=jnp.float32).reshape(16, 16)         # dense path

    ok = True
    for op in ("add", "sub", "mul", "div"):
        for apply_right in (False, True):
            for const in (const_scalar, const_per_ch, const_spatial):
                out = jax.block_until_ready(unbinary_op(x, const, op, apply_right))
                left, right = (const, x) if apply_right else (x, const)
                ref = _apply(left, right, op)
                if out.shape != ref.shape or not jnp.allclose(
                        out, ref, rtol=1e-6, atol=1e-6):
                    ok = False
                    print(f"MISMATCH op={op} apply_right={apply_right} "
                          f"const_shape={const.shape}")

    if ok:
        print("KERNEL_OK")
</pallas_src>

<mosaic_0001>
module attributes {stable_mosaic.version = 11 : i64} {
  func.func @_scalar_kernel(%arg0: i32, %arg1: memref<2x1024xf32, #tpu.memory_space<vmem>>, %arg2: memref<1xf32, #tpu.memory_space<smem>>, %arg3: memref<2x1024xf32, #tpu.memory_space<vmem>>) attributes {dimension_semantics = [#tpu.dimension_semantics<parallel>], iteration_bounds = array<i64: 1>, scalar_prefetch = 0 : i64, scratch_operands = 0 : i64, tpu.core_type = #tpu.core_type<tc>, window_params = [{transform_indices = @transform_0, window_bounds = array<i64: 2, 1024>}, {transform_indices = @transform_1, window_bounds = array<i64: 1>}, {transform_indices = @transform_2, window_bounds = array<i64: 2, 1024>}]} {
    %c0 = arith.constant 0 : index
    %c0_0 = arith.constant 0 : index
    %0 = vector.load %arg1[%c0, %c0_0] : memref<2x1024xf32, #tpu.memory_space<vmem>>, vector<2x1024xf32>
    %c0_1 = arith.constant 0 : index
    %1 = memref.load %arg2[%c0_1] : memref<1xf32, #tpu.memory_space<smem>>
    %2 = vector.broadcast %1 : f32 to vector<2x1024xf32>
    %3 = arith.addf %0, %2 : vector<2x1024xf32>
    %c0_2 = arith.constant 0 : index
    %c0_3 = arith.constant 0 : index
    %4 = vector.load %arg3[%c0_2, %c0_3] : memref<2x1024xf32, #tpu.memory_space<vmem>>, vector<2x1024xf32>
    tpu.vector_store %arg3[%c0_2, %c0_3], %3 {strides = array<i32>} : memref<2x1024xf32, #tpu.memory_space<vmem>>, vector<2x1024xf32>,
    return
  }
  func.func @transform_0(%arg0: i32) -> (i32, i32) {
    %c0_i32 = arith.constant 0 : i32
    %c0_i32_0 = arith.constant 0 : i32
    return %arg0, %c0_i32 : i32, i32
  }
  func.func @transform_1(%arg0: i32) -> i32 {
    %c0_i32 = arith.constant 0 : i32
    %c0_i32_0 = arith.constant 0 : i32
    return %c0_i32 : i32
  }
  func.func @transform_2(%arg0: i32) -> (i32, i32) {
    %c0_i32 = arith.constant 0 : i32
    %c0_i32_0 = arith.constant 0 : i32
    return %arg0, %c0_i32 : i32, i32
  }
}

</mosaic_0001>

<llo_original>
// kernel: tpu_custom_call.1
$region0: #{tpu_custom_call.1}
  #allocation0 [shape = 'u32[]', space=smem, size = 0x4, offset = 0x4, fixed_abs, tag = 'smem constant byte address 0x4 - core index']
  #allocation1 [shape = 'u32[144,128]{1,0:T(1,128)}', space=vmem, size = 0x12000, scoped, tag = 'internal scratch']
  #allocation2 [shape = 'f32[1]{0:T(128)S(6)}', space=smem, size = 0x200, scoped, tag = 'scoped memory for tpu_custom_call.1']
  %s0 = inlined_call_operand.hbm [shape: f32[2,1024], index: 0, kind: input, shape index: {}]
  %s1 = inlined_call_operand.<no memory space> [shape: f32[1], index: 1, kind: input, shape index: {}]
  %s2 = inlined_call_operand.hbm [shape: f32[2,1024], index: 2, kind: output, shape index: {}]
  %s3 = sld [smem:[#allocation0]]
  $region22: #{tpu_custom_call.1} parent=0
    _
  %s5 = ssub.s32 1, %s3
  %s6 = scalar_select 0, %s5, %s3
  %7 = sst [smem:[#allocation2]] %s1
  $region1: #{tpu_custom_call.1} parent=0
    #allocation3 [shape = 'u8[8192]{0}', space=vmem, size = 0x2000, scoped, tag = 'input window, operand 0, single buffered']
    #allocation4 [shape = 's32[1]{0}', space=sflag, size = 0x4, scoped, tag = 'scoped memory for tpu_custom_call.1']
    #allocation5 [shape = 's32[1]{0}', space=sflag, size = 0x4, scoped, tag = 'scoped memory for tpu_custom_call.1']
    #allocation6 [shape = 'u8[8192]{0}', space=vmem, size = 0x2000, scoped, tag = 'output window, operand 0, single buffered']
    %8 = vsyncpa [#allocation4], 0
    %9 = vsyncpa [#allocation5], 0
    // Predicated region
    $region2: #{tpu_custom_call.1} parent=1 // pred_check
      _
    $region3: #{tpu_custom_call.1} parent=1 // pred_check_branch
      %11 = sbr.rel (0) target = $region5
    $region4: #{tpu_custom_call.1} parent=1 // pred_region
      %s13 = ssub.s32 256, 256
      %14 = vsyncadd [#allocation4], %s13
      %s16 = sshll.u32 [#allocation3], 4
      %s17 = int_to_ptr.vmem [resolvable:$true] %s16
      %19 = dma.hbm_to_vmem [thread:$0]  %s0, 256, %s17, [#allocation4]
    $region5: #{tpu_custom_call.1} parent=1 // pred_fallthru
      _
    // Predicated region
    $region6: #{tpu_custom_call.1} parent=1 // pred_check
      _
    $region7: #{tpu_custom_call.1} parent=1 // pred_check_branch
      %21 = sbr.rel (0) target = $region9
    $region8: #{tpu_custom_call.1} parent=1 // pred_region
      _
    $region9: #{tpu_custom_call.1} parent=1 // pred_fallthru
      _
    // Predicated region
    $region10: #{tpu_custom_call.1} parent=1 // pred_check
      _
    $region11: #{tpu_custom_call.1} parent=1 // pred_check_branch
      %23 = sbr.rel (0) target = $region13
    $region12: #{tpu_custom_call.1} parent=1 // pred_region
      %24 = dma.done [#allocation4], 256
    $region13: #{tpu_custom_call.1} parent=1 // pred_fallthru
      _
    %v25 = vld [vmem:[#allocation3] sm:$0xff]
    %v26 = vld [vmem:[#allocation3 + $0x8] sm:$0xff]
    %s27 = sld [smem:[#allocation2]]
    %v28 = vstv %s27
    %v29 = vadd.f32 %v25, %v28
    %v30 = vadd.f32 %v26, %v28
    %31 = vst [vmem:[#allocation6] sm:$0xff] %v29
    %32 = vst [vmem:[#allocation6 + $0x8] sm:$0xff] %v30
    // Predicated region
    $region14: #{tpu_custom_call.1} parent=1 // pred_check
      _
    $region15: #{tpu_custom_call.1} parent=1 // pred_check_branch
      %34 = sbr.rel (0) target = $region17
    $region16: #{tpu_custom_call.1} parent=1 // pred_region
      %s36 = ssub.s32 256, 256
      %37 = vsyncadd [#allocation5], %s36
      %s39 = sshll.u32 [#allocation6], 4
      %s40 = int_to_ptr.vmem [resolvable:$true] %s39
      %42 = dma.vmem_to_hbm [thread:$0]  %s40, 256, %s2, [#allocation5]
    $region17: #{tpu_custom_call.1} parent=1 // pred_fallthru
      _
    // Predicated region
    $region18: #{tpu_custom_call.1} parent=1 // pred_check
      _
    $region19: #{tpu_custom_call.1} parent=1 // pred_check_branch
      %44 = sbr.rel (0) target = $region21
    $region20: #{tpu_custom_call.1} parent=1 // pred_region
      %45 = dma.done [#allocation5], 256
    $region21: #{tpu_custom_call.1} parent=1 // pred_fallthru
      _
    %46 = vsyncpa [#allocation4], 1
    %47 = vsyncpa [#allocation5], 1

</llo_original>
